<compile_context>
chip_gen: v7x
topology: tpu7x:2x2x1
jax: 0.10.0
libtpu: 0.0.40
codegen_flags: <defaults>
</compile_context>

<pallas_src>
import jax
import jax.numpy as jnp
from jax.experimental import pallas as pl
from jax.experimental.pallas import tpu as pltpu

EPS = 1e-5
LANE = 128


def _round_up(v, m):
    return (v + m - 1) // m * m


def _conv3_bn_relu(x, wf, b, g, be):
    """Conv1d(k=3, padding=1) as one fused MXU matmul, + training-mode BN + ReLU.

    x : (N, L, Cin)  activations in NLC layout.
    wf: (3*Cin, Cout) tap-major flattened weights ([x[l-1]; x[l]; x[l+1]]).
    b, g, be: (1, Cout) conv bias / BN gamma / BN beta.
    """
    N, L, Cin = x.shape
    Cout = wf.shape[-1]

    # Zero-handled boundary taps built from shifted views of x (no scratch pad).
    zero = jnp.zeros((N, 1, Cin), x.dtype)
    x_prev = jnp.concatenate([zero, x[:, : L - 1, :]], axis=1)   # x[l-1]
    x_next = jnp.concatenate([x[:, 1:, :], zero], axis=1)        # x[l+1]
    xcat = jnp.concatenate([x_prev, x, x_next], axis=-1)         # (N, L, 3*Cin)
    xcat = xcat.reshape(N * L, 3 * Cin)

    # One matmul with K = 3*Cin instead of 3 separate K=Cin matmuls.
    # (bf16 MXU inputs are an option on v6e/v7x; kept f32 for exact parity.)
    h = jnp.dot(xcat, wf, preferred_element_type=jnp.float32) + b  # (N*L, Cout)

    # Single-pass biased batch statistics over (N, L) per channel.
    inv_n = 1.0 / (N * L)
    s1 = jnp.sum(h, axis=0, keepdims=True)
    s2 = jnp.sum(h * h, axis=0, keepdims=True)
    mean = s1 * inv_n
    var = jnp.maximum(s2 * inv_n - mean * mean, 0.0)
    hn = (h - mean) * jax.lax.rsqrt(var + EPS)
    return jnp.maximum(hn * g + be, 0.0).reshape(N, L, Cout)


def encoder_block_kernel(x_ref, w1_ref, b1_ref, g1_ref, be1_ref,
                         w2_ref, b2_ref, g2_ref, be2_ref,
                         x_out_ref, p_out_ref):
    N, L, _ = x_ref.shape
    C = x_out_ref.shape[-1]

    h1 = _conv3_bn_relu(x_ref[...], w1_ref[...], b1_ref[...],
                        g1_ref[...], be1_ref[...])
    h2 = _conv3_bn_relu(h1, w2_ref[...], b2_ref[...],
                        g2_ref[...], be2_ref[...])

    x_out_ref[...] = h2
    # MaxPool1d(2): contiguous pairwise max along L (reshape form, no strided
    # sublane gathers).
    p_out_ref[...] = jnp.max(h2.reshape(N, L // 2, 2, C), axis=2)


def encoder_block(x_ncl, params):
    """x_ncl: (N, Cin, L) float32.  Returns (x, p) in PyTorch NCL layout."""
    N, Cin, L = x_ncl.shape
    Cout = params["w1"].shape[0]
    assert L % 2 == 0
    C_pad = _round_up(Cout, LANE)   # lane-dense channel axis

    # NCL -> NLC.  No L padding in HBM — boundary taps handled inside kernel.
    x_nlc = jnp.transpose(x_ncl, (0, 2, 1)).astype(jnp.float32)

    def prep_w(w, cin, cin_pad):
        # (Cout, Cin, 3) -> (3, Cin, Cout) -> zero-pad channels -> (3*Cin_pad, C_pad)
        wt = jnp.transpose(w, (2, 1, 0)).astype(jnp.float32)
        wt = jnp.pad(wt, ((0, 0), (0, cin_pad - cin), (0, C_pad - Cout)))
        return wt.reshape(3 * cin_pad, C_pad)

    def prep_v(v):
        return jnp.pad(v.astype(jnp.float32), (0, C_pad - Cout)).reshape(1, C_pad)

    w1 = prep_w(params["w1"], Cin, Cin)      # conv1 contracts over real Cin
    w2 = prep_w(params["w2"], Cout, C_pad)   # conv2 consumes lane-padded h1
    b1, g1, be1 = prep_v(params["b1"]), prep_v(params["g1"]), prep_v(params["be1"])
    b2, g2, be2 = prep_v(params["b2"]), prep_v(params["g2"]), prep_v(params["be2"])

    inputs = (x_nlc, w1, b1, g1, be1, w2, b2, g2, be2)
    # NOTE: ndim bound at definition time (no late-binding closure bug).
    in_specs = [pl.BlockSpec(a.shape, lambda i, nd=a.ndim: (0,) * nd)
                for a in inputs]

    out_shapes = (
        jax.ShapeDtypeStruct((N, L, C_pad), jnp.float32),       # x (pre-pool)
        jax.ShapeDtypeStruct((N, L // 2, C_pad), jnp.float32),  # p (pooled)
    )
    out_specs = [
        pl.BlockSpec((N, L, C_pad), lambda i: (0, 0, 0)),
        pl.BlockSpec((N, L // 2, C_pad), lambda i: (0, 0, 0)),
    ]

    x_nlc_out, p_nlc_out = pl.pallas_call(
        encoder_block_kernel,
        out_shape=out_shapes,
        grid_spec=pltpu.PrefetchScalarGridSpec(
            num_scalar_prefetch=0,
            grid=(1,),
            in_specs=in_specs,
            out_specs=out_specs,
        ),
        compiler_params=pltpu.CompilerParams(
            dimension_semantics=("arbitrary",)),
    )(*inputs)

    # Strip channel padding, NLC -> NCL to match the PyTorch output convention.
    x_out = jnp.transpose(x_nlc_out[:, :, :Cout], (0, 2, 1))
    p_out = jnp.transpose(p_nlc_out[:, :, :Cout], (0, 2, 1))
    return x_out, p_out


def _ref_encoder_block(x, p):
    """Pure-JAX reference (matches PyTorch training-mode forward)."""
    def conv(x, w, b):
        y = jax.lax.conv_general_dilated(
            x, w, window_strides=(1,), padding=((1, 1),),
            dimension_numbers=("NCH", "OIH", "NCH"))
        return y + b[None, :, None]

    def bn_relu(h, g, be):
        mean = jnp.mean(h, axis=(0, 2), keepdims=True)
        var = jnp.mean((h - mean) ** 2, axis=(0, 2), keepdims=True)
        hn = (h - mean) / jnp.sqrt(var + EPS)
        return jnp.maximum(hn * g[None, :, None] + be[None, :, None], 0.0)

    h = bn_relu(conv(x, p["w1"], p["b1"]), p["g1"], p["be1"])
    h = bn_relu(conv(h, p["w2"], p["b2"]), p["g2"], p["be2"])
    pool = jnp.max(h.reshape(h.shape[0], h.shape[1], -1, 2), axis=-1)
    return h, pool


if __name__ == "__main__":
    N, Cin, Cout, L = 2, 4, 8, 16

    key = jax.random.PRNGKey(0)
    ks = jax.random.split(key, 9)
    x = jax.random.normal(ks[0], (N, Cin, L), jnp.float32)

    params = dict(
        w1=0.1 * jax.random.normal(ks[1], (Cout, Cin, 3), jnp.float32),
        b1=0.1 * jax.random.normal(ks[2], (Cout,), jnp.float32),
        g1=1.0 + 0.1 * jax.random.normal(ks[3], (Cout,), jnp.float32),
        be1=0.1 * jax.random.normal(ks[4], (Cout,), jnp.float32),
        w2=0.1 * jax.random.normal(ks[5], (Cout, Cout, 3), jnp.float32),
        b2=0.1 * jax.random.normal(ks[6], (Cout,), jnp.float32),
        g2=1.0 + 0.1 * jax.random.normal(ks[7], (Cout,), jnp.float32),
        be2=0.1 * jax.random.normal(ks[8], (Cout,), jnp.float32),
    )

    x_out, p_out = encoder_block(x, params)
    jax.block_until_ready((x_out, p_out))

    assert x_out.shape == (N, Cout, L)
    assert p_out.shape == (N, Cout, L // 2)

    # Numerical check against a pure-JAX reference of the PyTorch forward.
    x_ref, p_ref = _ref_encoder_block(x, params)
    assert jnp.max(jnp.abs(x_out - x_ref)) < 1e-4
    assert jnp.max(jnp.abs(p_out - p_ref)) < 1e-4

    print("KERNEL_OK")
</pallas_src>

<mosaic_0001>
module attributes {stable_mosaic.version = 11 : i64} {
  func.func @encoder_block_kernel(%arg0: i32, %arg1: memref<2x16x4xf32, #tpu.memory_space<vmem>>, %arg2: memref<12x128xf32, #tpu.memory_space<vmem>>, %arg3: memref<1x128xf32, #tpu.memory_space<vmem>>, %arg4: memref<1x128xf32, #tpu.memory_space<vmem>>, %arg5: memref<1x128xf32, #tpu.memory_space<vmem>>, %arg6: memref<384x128xf32, #tpu.memory_space<vmem>>, %arg7: memref<1x128xf32, #tpu.memory_space<vmem>>, %arg8: memref<1x128xf32, #tpu.memory_space<vmem>>, %arg9: memref<1x128xf32, #tpu.memory_space<vmem>>, %arg10: memref<2x16x128xf32, #tpu.memory_space<vmem>>, %arg11: memref<2x8x128xf32, #tpu.memory_space<vmem>>) attributes {dimension_semantics = [#tpu.dimension_semantics<arbitrary>], iteration_bounds = array<i64: 1>, scalar_prefetch = 0 : i64, scratch_operands = 0 : i64, tpu.core_type = #tpu.core_type<tc>, window_params = [{pipeline_mode = #tpu.pipeline_mode<synchronous>, transform_indices = @transform_0, window_bounds = array<i64: 2, 16, 4>}, {pipeline_mode = #tpu.pipeline_mode<synchronous>, transform_indices = @transform_1, window_bounds = array<i64: 12, 128>}, {pipeline_mode = #tpu.pipeline_mode<synchronous>, transform_indices = @transform_2, window_bounds = array<i64: 1, 128>}, {pipeline_mode = #tpu.pipeline_mode<synchronous>, transform_indices = @transform_3, window_bounds = array<i64: 1, 128>}, {pipeline_mode = #tpu.pipeline_mode<synchronous>, transform_indices = @transform_4, window_bounds = array<i64: 1, 128>}, {pipeline_mode = #tpu.pipeline_mode<synchronous>, transform_indices = @transform_5, window_bounds = array<i64: 384, 128>}, {pipeline_mode = #tpu.pipeline_mode<synchronous>, transform_indices = @transform_6, window_bounds = array<i64: 1, 128>}, {pipeline_mode = #tpu.pipeline_mode<synchronous>, transform_indices = @transform_7, window_bounds = array<i64: 1, 128>}, {pipeline_mode = #tpu.pipeline_mode<synchronous>, transform_indices = @transform_8, window_bounds = array<i64: 1, 128>}, {pipeline_mode = #tpu.pipeline_mode<synchronous>, transform_indices = @transform_9, window_bounds = array<i64: 2, 16, 128>}, {pipeline_mode = #tpu.pipeline_mode<synchronous>, transform_indices = @transform_10, window_bounds = array<i64: 2, 8, 128>}]} {
    %c0 = arith.constant 0 : index
    %c0_0 = arith.constant 0 : index
    %c0_1 = arith.constant 0 : index
    %0 = vector.load %arg1[%c0, %c0_0, %c0_1] : memref<2x16x4xf32, #tpu.memory_space<vmem>>, vector<2x16x4xf32>
    %c0_2 = arith.constant 0 : index
    %c0_3 = arith.constant 0 : index
    %1 = vector.load %arg2[%c0_2, %c0_3] : memref<12x128xf32, #tpu.memory_space<vmem>>, vector<12x128xf32>
    %c0_4 = arith.constant 0 : index
    %c0_5 = arith.constant 0 : index
    %2 = vector.load %arg3[%c0_4, %c0_5] : memref<1x128xf32, #tpu.memory_space<vmem>>, vector<1x128xf32>
    %c0_6 = arith.constant 0 : index
    %c0_7 = arith.constant 0 : index
    %3 = vector.load %arg4[%c0_6, %c0_7] : memref<1x128xf32, #tpu.memory_space<vmem>>, vector<1x128xf32>
    %c0_8 = arith.constant 0 : index
    %c0_9 = arith.constant 0 : index
    %4 = vector.load %arg5[%c0_8, %c0_9] : memref<1x128xf32, #tpu.memory_space<vmem>>, vector<1x128xf32>
    %cst = arith.constant 0.000000e+00 : f32
    %5 = vector.broadcast %cst : f32 to vector<2x1x4xf32>
    %6 = vector.extract_strided_slice %0 {offsets = [0, 0, 0], sizes = [2, 15, 4], strides = [1, 1, 1]} : vector<2x16x4xf32> to vector<2x15x4xf32>
    %7 = tpu.concatenate %5, %6 in 1 : vector<2x1x4xf32>, vector<2x15x4xf32> -> vector<2x16x4xf32>
    %8 = vector.extract_strided_slice %0 {offsets = [0, 1, 0], sizes = [2, 15, 4], strides = [1, 1, 1]} : vector<2x16x4xf32> to vector<2x15x4xf32>
    %9 = tpu.concatenate %8, %5 in 1 : vector<2x15x4xf32>, vector<2x1x4xf32> -> vector<2x16x4xf32>
    %10 = tpu.concatenate %7, %0, %9 in 2 : vector<2x16x4xf32>, vector<2x16x4xf32>, vector<2x16x4xf32> -> vector<2x16x12xf32>
    %11 = vector.shape_cast %10 : vector<2x16x12xf32> to vector<32x12xf32>
    %cst_10 = arith.constant dense<0.000000e+00> : vector<32x128xf32>
    %12 = tpu.matmul %11, %1, %cst_10 {dimension_numbers = #tpu.dot_dimension_numbers<[1], [0], [0], [1], [0, 0, 1, 1], [], []>} : vector<32x12xf32>, vector<12x128xf32>, vector<32x128xf32> -> vector<32x128xf32>
    %13 = vector.broadcast %2 : vector<1x128xf32> to vector<32x128xf32>
    %14 = arith.addf %12, %13 : vector<32x128xf32>
    %cst_11 = arith.constant dense<0.000000e+00> : vector<128xf32>
    %15 = vector.multi_reduction <add>, %14, %cst_11 [0] : vector<32x128xf32> to vector<128xf32>
    %16 = vector.shape_cast %15 : vector<128xf32> to vector<1x128xf32>
    %17 = arith.mulf %14, %14 : vector<32x128xf32>
    %cst_12 = arith.constant dense<0.000000e+00> : vector<128xf32>
    %18 = vector.multi_reduction <add>, %17, %cst_12 [0] : vector<32x128xf32> to vector<128xf32>
    %19 = vector.shape_cast %18 : vector<128xf32> to vector<1x128xf32>
    %cst_13 = arith.constant 3.125000e-02 : f32
    %20 = vector.broadcast %cst_13 : f32 to vector<1x128xf32>
    %21 = arith.mulf %16, %20 : vector<1x128xf32>
    %cst_14 = arith.constant 3.125000e-02 : f32
    %22 = vector.broadcast %cst_14 : f32 to vector<1x128xf32>
    %23 = arith.mulf %19, %22 : vector<1x128xf32>
    %24 = arith.mulf %21, %21 : vector<1x128xf32>
    %25 = arith.subf %23, %24 : vector<1x128xf32>
    %cst_15 = arith.constant 0.000000e+00 : f32
    %26 = vector.broadcast %cst_15 : f32 to vector<1x128xf32>
    %27 = arith.maximumf %25, %26 : vector<1x128xf32>
    %28 = vector.broadcast %21 : vector<1x128xf32> to vector<32x128xf32>
    %29 = arith.subf %14, %28 : vector<32x128xf32>
    %cst_16 = arith.constant 9.99999974E-6 : f32
    %30 = vector.broadcast %cst_16 : f32 to vector<1x128xf32>
    %31 = arith.addf %27, %30 : vector<1x128xf32>
    %32 = math.rsqrt %31 : vector<1x128xf32>
    %33 = vector.broadcast %32 : vector<1x128xf32> to vector<32x128xf32>
    %34 = arith.mulf %29, %33 : vector<32x128xf32>
    %35 = vector.broadcast %3 : vector<1x128xf32> to vector<32x128xf32>
    %36 = arith.mulf %34, %35 : vector<32x128xf32>
    %37 = vector.broadcast %4 : vector<1x128xf32> to vector<32x128xf32>
    %38 = arith.addf %36, %37 : vector<32x128xf32>
    %cst_17 = arith.constant 0.000000e+00 : f32
    %39 = vector.broadcast %cst_17 : f32 to vector<32x128xf32>
    %40 = arith.maximumf %38, %39 : vector<32x128xf32>
    %41 = vector.shape_cast %40 : vector<32x128xf32> to vector<2x16x128xf32>
    %c0_18 = arith.constant 0 : index
    %c0_19 = arith.constant 0 : index
    %42 = vector.load %arg6[%c0_18, %c0_19] : memref<384x128xf32, #tpu.memory_space<vmem>>, vector<384x128xf32>
    %c0_20 = arith.constant 0 : index
    %c0_21 = arith.constant 0 : index
    %43 = vector.load %arg7[%c0_20, %c0_21] : memref<1x128xf32, #tpu.memory_space<vmem>>, vector<1x128xf32>
    %c0_22 = arith.constant 0 : index
    %c0_23 = arith.constant 0 : index
    %44 = vector.load %arg8[%c0_22, %c0_23] : memref<1x128xf32, #tpu.memory_space<vmem>>, vector<1x128xf32>
    %c0_24 = arith.constant 0 : index
    %c0_25 = arith.constant 0 : index
    %45 = vector.load %arg9[%c0_24, %c0_25] : memref<1x128xf32, #tpu.memory_space<vmem>>, vector<1x128xf32>
    %cst_26 = arith.constant 0.000000e+00 : f32
    %46 = vector.broadcast %cst_26 : f32 to vector<2x1x128xf32>
    %47 = vector.extract_strided_slice %41 {offsets = [0, 0, 0], sizes = [2, 15, 128], strides = [1, 1, 1]} : vector<2x16x128xf32> to vector<2x15x128xf32>
    %48 = tpu.concatenate %46, %47 in 1 : vector<2x1x128xf32>, vector<2x15x128xf32> -> vector<2x16x128xf32>
    %49 = vector.extract_strided_slice %41 {offsets = [0, 1, 0], sizes = [2, 15, 128], strides = [1, 1, 1]} : vector<2x16x128xf32> to vector<2x15x128xf32>
    %50 = tpu.concatenate %49, %46 in 1 : vector<2x15x128xf32>, vector<2x1x128xf32> -> vector<2x16x128xf32>
    %51 = tpu.concatenate %48, %41, %50 in 2 : vector<2x16x128xf32>, vector<2x16x128xf32>, vector<2x16x128xf32> -> vector<2x16x384xf32>
    %52 = vector.shape_cast %51 : vector<2x16x384xf32> to vector<32x384xf32>
    %cst_27 = arith.constant dense<0.000000e+00> : vector<32x128xf32>
    %53 = tpu.matmul %52, %42, %cst_27 {dimension_numbers = #tpu.dot_dimension_numbers<[1], [0], [0], [1], [0, 0, 1, 1], [], []>} : vector<32x384xf32>, vector<384x128xf32>, vector<32x128xf32> -> vector<32x128xf32>
    %54 = vector.broadcast %43 : vector<1x128xf32> to vector<32x128xf32>
    %55 = arith.addf %53, %54 : vector<32x128xf32>
    %cst_28 = arith.constant dense<0.000000e+00> : vector<128xf32>
    %56 = vector.multi_reduction <add>, %55, %cst_28 [0] : vector<32x128xf32> to vector<128xf32>
    %57 = vector.shape_cast %56 : vector<128xf32> to vector<1x128xf32>
    %58 = arith.mulf %55, %55 : vector<32x128xf32>
    %cst_29 = arith.constant dense<0.000000e+00> : vector<128xf32>
    %59 = vector.multi_reduction <add>, %58, %cst_29 [0] : vector<32x128xf32> to vector<128xf32>
    %60 = vector.shape_cast %59 : vector<128xf32> to vector<1x128xf32>
    %cst_30 = arith.constant 3.125000e-02 : f32
    %61 = vector.broadcast %cst_30 : f32 to vector<1x128xf32>
    %62 = arith.mulf %57, %61 : vector<1x128xf32>
    %cst_31 = arith.constant 3.125000e-02 : f32
    %63 = vector.broadcast %cst_31 : f32 to vector<1x128xf32>
    %64 = arith.mulf %60, %63 : vector<1x128xf32>
    %65 = arith.mulf %62, %62 : vector<1x128xf32>
    %66 = arith.subf %64, %65 : vector<1x128xf32>
    %cst_32 = arith.constant 0.000000e+00 : f32
    %67 = vector.broadcast %cst_32 : f32 to vector<1x128xf32>
    %68 = arith.maximumf %66, %67 : vector<1x128xf32>
    %69 = vector.broadcast %62 : vector<1x128xf32> to vector<32x128xf32>
    %70 = arith.subf %55, %69 : vector<32x128xf32>
    %cst_33 = arith.constant 9.99999974E-6 : f32
    %71 = vector.broadcast %cst_33 : f32 to vector<1x128xf32>
    %72 = arith.addf %68, %71 : vector<1x128xf32>
    %73 = math.rsqrt %72 : vector<1x128xf32>
    %74 = vector.broadcast %73 : vector<1x128xf32> to vector<32x128xf32>
    %75 = arith.mulf %70, %74 : vector<32x128xf32>
    %76 = vector.broadcast %44 : vector<1x128xf32> to vector<32x128xf32>
    %77 = arith.mulf %75, %76 : vector<32x128xf32>
    %78 = vector.broadcast %45 : vector<1x128xf32> to vector<32x128xf32>
    %79 = arith.addf %77, %78 : vector<32x128xf32>
    %cst_34 = arith.constant 0.000000e+00 : f32
    %80 = vector.broadcast %cst_34 : f32 to vector<32x128xf32>
    %81 = arith.maximumf %79, %80 : vector<32x128xf32>
    %82 = vector.shape_cast %81 : vector<32x128xf32> to vector<2x16x128xf32>
    %c0_35 = arith.constant 0 : index
    %c0_36 = arith.constant 0 : index
    %c0_37 = arith.constant 0 : index
    %83 = vector.load %arg10[%c0_35, %c0_36, %c0_37] : memref<2x16x128xf32, #tpu.memory_space<vmem>>, vector<2x16x128xf32>
    tpu.vector_store %arg10[%c0_35, %c0_36, %c0_37], %82 {strides = array<i32>} : memref<2x16x128xf32, #tpu.memory_space<vmem>>, vector<2x16x128xf32>,
    %84 = vector.shape_cast %82 : vector<2x16x128xf32> to vector<2x8x2x128xf32>
    %cst_38 = arith.constant dense<0xFF800000> : vector<2x8x128xf32>
    %85 = vector.multi_reduction <maximumf>, %84, %cst_38 [2] : vector<2x8x2x128xf32> to vector<2x8x128xf32>
    %c0_39 = arith.constant 0 : index
    %c0_40 = arith.constant 0 : index
    %c0_41 = arith.constant 0 : index
    %86 = vector.load %arg11[%c0_39, %c0_40, %c0_41] : memref<2x8x128xf32, #tpu.memory_space<vmem>>, vector<2x8x128xf32>
    tpu.vector_store %arg11[%c0_39, %c0_40, %c0_41], %85 {strides = array<i32>} : memref<2x8x128xf32, #tpu.memory_space<vmem>>, vector<2x8x128xf32>,
    return
  }
  func.func @transform_0(%arg0: i32) -> (i32, i32, i32) {
    %c0_i32 = arith.constant 0 : i32
    %c0_i32_0 = arith.constant 0 : i32
    %c0_i32_1 = arith.constant 0 : i32
    %c0_i32_2 = arith.constant 0 : i32
    return %c0_i32, %c0_i32_0, %c0_i32_1 : i32, i32, i32
  }
  func.func @transform_1(%arg0: i32) -> (i32, i32) {
    %c0_i32 = arith.constant 0 : i32
    %c0_i32_0 = arith.constant 0 : i32
    %c0_i32_1 = arith.constant 0 : i32
    return %c0_i32, %c0_i32_0 : i32, i32
  }
  func.func @transform_2(%arg0: i32) -> (i32, i32) {
    %c0_i32 = arith.constant 0 : i32
    %c0_i32_0 = arith.constant 0 : i32
    %c0_i32_1 = arith.constant 0 : i32
    return %c0_i32, %c0_i32_0 : i32, i32
  }
  func.func @transform_3(%arg0: i32) -> (i32, i32) {
    %c0_i32 = arith.constant 0 : i32
    %c0_i32_0 = arith.constant 0 : i32
    %c0_i32_1 = arith.constant 0 : i32
    return %c0_i32, %c0_i32_0 : i32, i32
  }
  func.func @transform_4(%arg0: i32) -> (i32, i32) {
    %c0_i32 = arith.constant 0 : i32
    %c0_i32_0 = arith.constant 0 : i32
    %c0_i32_1 = arith.constant 0 : i32
    return %c0_i32, %c0_i32_0 : i32, i32
  }
  func.func @transform_5(%arg0: i32) -> (i32, i32) {
    %c0_i32 = arith.constant 0 : i32
    %c0_i32_0 = arith.constant 0 : i32
    %c0_i32_1 = arith.constant 0 : i32
    return %c0_i32, %c0_i32_0 : i32, i32
  }
  func.func @transform_6(%arg0: i32) -> (i32, i32) {
    %c0_i32 = arith.constant 0 : i32
    %c0_i32_0 = arith.constant 0 : i32
    %c0_i32_1 = arith.constant 0 : i32
    return %c0_i32, %c0_i32_0 : i32, i32
  }
  func.func @transform_7(%arg0: i32) -> (i32, i32) {
    %c0_i32 = arith.constant 0 : i32
    %c0_i32_0 = arith.constant 0 : i32
    %c0_i32_1 = arith.constant 0 : i32
    return %c0_i32, %c0_i32_0 : i32, i32
  }
  func.func @transform_8(%arg0: i32) -> (i32, i32) {
    %c0_i32 = arith.constant 0 : i32
    %c0_i32_0 = arith.constant 0 : i32
    %c0_i32_1 = arith.constant 0 : i32
    return %c0_i32, %c0_i32_0 : i32, i32
  }
  func.func @transform_9(%arg0: i32) -> (i32, i32, i32) {
    %c0_i32 = arith.constant 0 : i32
    %c0_i32_0 = arith.constant 0 : i32
    %c0_i32_1 = arith.constant 0 : i32
    %c0_i32_2 = arith.constant 0 : i32
    return %c0_i32, %c0_i32_0, %c0_i32_1 : i32, i32, i32
  }
  func.func @transform_10(%arg0: i32) -> (i32, i32, i32) {
    %c0_i32 = arith.constant 0 : i32
    %c0_i32_0 = arith.constant 0 : i32
    %c0_i32_1 = arith.constant 0 : i32
    %c0_i32_2 = arith.constant 0 : i32
    return %c0_i32, %c0_i32_0, %c0_i32_1 : i32, i32, i32
  }
}

</mosaic_0001>

<llo_original>
// kernel: tpu_custom_call.1
$region0: #{tpu_custom_call.1}
  #allocation0 [shape = 'u32[]', space=smem, size = 0x4, offset = 0x4, fixed_abs, tag = 'smem constant byte address 0x4 - core index']
  #allocation1 [shape = 'u32[144,128]{1,0:T(1,128)}', space=vmem, size = 0x12000, scoped, tag = 'internal scratch']
  %s0 = inlined_call_operand.vmem [shape: f32[2,16,4], index: 0, kind: input, shape index: {}]
  %s1 = inlined_call_operand.vmem [shape: f32[12,128], index: 1, kind: input, shape index: {}]
  %s2 = inlined_call_operand.vmem [shape: f32[1,128], index: 2, kind: input, shape index: {}]
  %s3 = inlined_call_operand.vmem [shape: f32[1,128], index: 3, kind: input, shape index: {}]
  %s4 = inlined_call_operand.vmem [shape: f32[1,128], index: 4, kind: input, shape index: {}]
  %s5 = inlined_call_operand.hbm [shape: f32[384,128], index: 5, kind: input, shape index: {}]
  %s6 = inlined_call_operand.vmem [shape: f32[1,128], index: 6, kind: input, shape index: {}]
  %s7 = inlined_call_operand.vmem [shape: f32[1,128], index: 7, kind: input, shape index: {}]
  %s8 = inlined_call_operand.vmem [shape: f32[1,128], index: 8, kind: input, shape index: {}]
  %s9 = inlined_call_operand.hbm [shape: f32[2,16,128], index: 9, kind: output, shape index: {0}]
  %s10 = inlined_call_operand.hbm [shape: f32[2,8,128], index: 10, kind: output, shape index: {1}]
  %11 = xla_tuple %s9, %s10
  %s12 = sld [smem:[#allocation0]]
  $region58: #{tpu_custom_call.1} parent=0
    _
  %s14 = ssub.s32 1, %s12
  %s15 = scalar_select 0, %s14, %s12
  $region1: #{tpu_custom_call.1} parent=0
    #allocation2 [shape = 'u8[196608]{0}', space=vmem, size = 0x30000, scoped, tag = 'input window, operand 5, single buffered']
    #allocation3 [shape = 's32[1]{0}', space=sflag, size = 0x4, scoped, tag = 'scoped memory for tpu_custom_call.1']
    #allocation4 [shape = 's32[1]{0}', space=sflag, size = 0x4, scoped, tag = 'scoped memory for tpu_custom_call.1']
    #allocation5 [shape = 'u8[16384]{0}', space=vmem, size = 0x4000, scoped, tag = 'output window, operand 0, single buffered']
    #allocation6 [shape = 'u8[8192]{0}', space=vmem, size = 0x2000, scoped, tag = 'output window, operand 1, single buffered']
    #allocation7 [shape = 's32[1]{0}', space=sflag, size = 0x4, scoped, tag = 'scoped memory for tpu_custom_call.1']
    %16 = vsyncpa [#allocation3], 0
    %17 = vsyncpa [#allocation4], 0
    %18 = vsyncpa [#allocation7], 0
    // Predicated region
    $region2: #{tpu_custom_call.1} parent=1 // pred_check
      _
    $region3: #{tpu_custom_call.1} parent=1 // pred_check_branch
      %20 = sbr.rel (0) target = $region5
    $region4: #{tpu_custom_call.1} parent=1 // pred_region
      _
    $region5: #{tpu_custom_call.1} parent=1 // pred_fallthru
      _
    // Predicated region
    $region6: #{tpu_custom_call.1} parent=1 // pred_check
      _
    $region7: #{tpu_custom_call.1} parent=1 // pred_check_branch
      %22 = sbr.rel (0) target = $region9
    $region8: #{tpu_custom_call.1} parent=1 // pred_region
      _
    $region9: #{tpu_custom_call.1} parent=1 // pred_fallthru
      _
    // Predicated region
    $region10: #{tpu_custom_call.1} parent=1 // pred_check
      _
    $region11: #{tpu_custom_call.1} parent=1 // pred_check_branch
      %24 = sbr.rel (0) target = $region13
    $region12: #{tpu_custom_call.1} parent=1 // pred_region
      _
    $region13: #{tpu_custom_call.1} parent=1 // pred_fallthru
      _
    // Predicated region
    $region14: #{tpu_custom_call.1} parent=1 // pred_check
      _
    $region15: #{tpu_custom_call.1} parent=1 // pred_check_branch
      %26 = sbr.rel (0) target = $region17
    $region16: #{tpu_custom_call.1} parent=1 // pred_region
      _
    $region17: #{tpu_custom_call.1} parent=1 // pred_fallthru
      _
    // Predicated region
    $region18: #{tpu_custom_call.1} parent=1 // pred_check
      _
    $region19: #{tpu_custom_call.1} parent=1 // pred_check_branch
      %28 = sbr.rel (0) target = $region21
    $region20: #{tpu_custom_call.1} parent=1 // pred_region
      _
    $region21: #{tpu_custom_call.1} parent=1 // pred_fallthru
      _
    // Predicated region
    $region22: #{tpu_custom_call.1} parent=1 // pred_check
      _
    $region23: #{tpu_custom_call.1} parent=1 // pred_check_branch
      %30 = sbr.rel (0) target = $region25
    $region24: #{tpu_custom_call.1} parent=1 // pred_region
      %s32 = ssub.s32 6144, 6144
      %33 = vsyncadd [#allocation3], %s32
      %s34 = sshll.u32 [#allocation2], 4
      %s35 = int_to_ptr.vmem [resolvable:$true] %s34
      %40 = dma.hbm_to_vmem [thread:$0]  %s5, 6144, %s35, [#allocation3], 128, 128, 8
    $region25: #{tpu_custom_call.1} parent=1 // pred_fallthru
      _
    // Predicated region
    $region26: #{tpu_custom_call.1} parent=1 // pred_check
      _
    $region27: #{tpu_custom_call.1} parent=1 // pred_check_branch
      %42 = sbr.rel (0) target = $region29
    $region28: #{tpu_custom_call.1} parent=1 // pred_region
      _
    $region29: #{tpu_custom_call.1} parent=1 // pred_fallthru
      _
    // Predicated region
    $region30: #{tpu_custom_call.1} parent=1 // pred_check
      _
    $region31: #{tpu_custom_call.1} parent=1 // pred_check_branch
      %44 = sbr.rel (0) target = $region33
    $region32: #{tpu_custom_call.1} parent=1 // pred_region
      _
    $region33: #{tpu_custom_call.1} parent=1 // pred_fallthru
      _
    // Predicated region
    $region34: #{tpu_custom_call.1} parent=1 // pred_check
      _
    $region35: #{tpu_custom_call.1} parent=1 // pred_check_branch
      %46 = sbr.rel (0) target = $region37
    $region36: #{tpu_custom_call.1} parent=1 // pred_region
      _
    $region37: #{tpu_custom_call.1} parent=1 // pred_fallthru
      _
    // Predicated region
    $region38: #{tpu_custom_call.1} parent=1 // pred_check
      _
    $region39: #{tpu_custom_call.1} parent=1 // pred_check_branch
      %48 = sbr.rel (0) target = $region41
    $region40: #{tpu_custom_call.1} parent=1 // pred_region
      %49 = dma.done [#allocation3], 6144
    $region41: #{tpu_custom_call.1} parent=1 // pred_fallthru
      _
    %v50 = vld [vmem:[%s0] sm:$0xff]
    %v51 = vld [vmem:[%s0 + $0x8] sm:$0xff]
    %v52 = vld [vmem:[%s0 + $0x10] sm:$0xff]
    %v53 = vld [vmem:[%s0 + $0x18] sm:$0xff]
    %v54 = vld [vmem:[%s1] sm:$0xff]
    %v55 = vld [vmem:[%s1 + $0x8] sm:$0xf]
    %v56 = vld [vmem:[%s2] sm:$0x1]
    %v57 = vld [vmem:[%s3] sm:$0x1]
    %v58 = vld [vmem:[%s4] sm:$0x1]
    %vm63 = vcmask 1040384
    %v64 = vrot.slane %v50, 7
    %v65 = vrot.slane %v51, 7
    %v66 = vsel %vm63, %v64, %v65
    %v67 = vrot.slane %v52, 7
    %v68 = vrot.slane %v53, 7
    %v69 = vsel %vm63, %v67, %v68
    %v74 = vsel %vm63, 0.0, %v64
    %v75 = vsel %vm63, 0.0, %v67
    %vm76 = vcmask 1046528
    %v77 = vrot.slane %v50, 1
    %v78 = vrot.slane %v51, 1
    %v79 = vsel %vm76, %v77, %v78
    %v80 = vrot.slane %v52, 1
    %v81 = vrot.slane %v53, 1
    %v82 = vsel %vm76, %v80, %v81
    %v85 = vsel %vm76, %v78, 0.0
    %v86 = vsel %vm76, %v81, 0.0
    %87 = vrot.lane.b32.xlu0 %v50, 4
    %v88 = vpop.permute.xlu0 %87
    %89 = vrot.lane.b32.xlu0 %v51, 4
    %v90 = vpop.permute.xlu0 %89
    %91 = vrot.lane.b32.xlu0 %v52, 4
    %v92 = vpop.permute.xlu0 %91
    %93 = vrot.lane.b32.xlu0 %v53, 4
    %v94 = vpop.permute.xlu0 %93
    %101 = vrot.lane.b32.xlu0 %v79, 8
    %v102 = vpop.permute.xlu0 %101
    %103 = vrot.lane.b32.xlu0 %v85, 8
    %v104 = vpop.permute.xlu0 %103
    %105 = vrot.lane.b32.xlu0 %v82, 8
    %v106 = vpop.permute.xlu0 %105
    %107 = vrot.lane.b32.xlu0 %v86, 8
    %v108 = vpop.permute.xlu0 %107
    %vm113 = vcmask 31744
    %v114 = vsel %vm113, %v74, %v88
    %v115 = vsel %vm113, %v66, %v90
    %v116 = vsel %vm113, %v75, %v92
    %v117 = vsel %vm113, %v69, %v94
    %vm118 = vcmask 64512
    %v119 = vsel %vm118, %v114, %v102
    %v120 = vsel %vm118, %v115, %v104
    %v121 = vsel %vm118, %v116, %v106
    %v122 = vsel %vm118, %v117, %v108
    %v124 = vlaneseq
    %v125 = vshrl.u32 %v124, 7
    %v126 = vsub.s32 0, %v125
    %v127 = vrot.slane %v56, %v126
    %vm129 = vcmask 97280
    %v131 = vsel %vm129, %v119, 0
    %v134 = vsel %vm129, %v120, 0
    %v137 = vsel %vm129, %v121, 0
    %v140 = vsel %vm129, %v122, 0
    %vm142 = vcmask 1043456
    %v144 = vsel %vm142, %v55, 0
    %146 = vmatprep.subr.mxu0 0.0
    %147 = vmatpush1.msra.mxu0 %v54
    %148 = vmatprep.subr.mxu0 0.0
    %149 = vmatpush1.msra.mxu0 %v144
    %150 = vmatprep.subr.mxu0 0.0
    %151 = vmatpush1.msra.mxu0 0.0
    %152 = vmatprep.subr.mxu0 0.0
    %153 = vmatpush1.msra.mxu0 0.0
    %154 = vmatprep.subr.mxu0 0.0
    %155 = vmatpush1.msra.mxu0 0.0
    %156 = vmatprep.subr.mxu0 0.0
    %157 = vmatpush1.msra.mxu0 0.0
    %158 = vmatprep.subr.mxu0 0.0
    %159 = vmatpush1.msra.mxu0 0.0
    %160 = vmatprep.subr.mxu0 0.0
    %161 = vmatpush1.msra.mxu0 0.0
    %162 = vmatprep.subr.mxu0 0.0
    %163 = vmatpush1.msra.mxu0 0.0
    %164 = vmatprep.subr.mxu0 0.0
    %165 = vmatpush1.msra.mxu0 0.0
    %166 = vmatprep.subr.mxu0 0.0
    %167 = vmatpush1.msra.mxu0 0.0
    %168 = vmatprep.subr.mxu0 0.0
    %169 = vmatpush1.msra.mxu0 0.0
    %170 = vmatprep.subr.mxu0 0.0
    %171 = vmatpush1.msra.mxu0 0.0
    %172 = vmatprep.subr.mxu0 0.0
    %173 = vmatpush1.msra.mxu0 0.0
    %174 = vmatprep.subr.mxu0 0.0
    %175 = vmatpush1.msra.mxu0 0.0
    %176 = vmatprep.subr.mxu0 0.0
    %177 = vmatpush1.msra.mxu0 0.0
    %178 = vmatprep.subr.mxu0 0.0
    %179 = vmatpush1.msra.mxu0 0.0
    %180 = vmatprep.subr.mxu0 0.0
    %181 = vmatpush1.msra.mxu0 0.0
    %182 = vmatprep.subr.mxu0 0.0
    %183 = vmatpush1.msra.mxu0 0.0
    %184 = vmatprep.subr.mxu0 0.0
    %185 = vmatpush1.msra.mxu0 0.0
    %186 = vmatprep.subr.mxu0 0.0
    %187 = vmatpush1.msra.mxu0 0.0
    %188 = vmatprep.subr.mxu0 0.0
    %189 = vmatpush1.msra.mxu0 0.0
    %190 = vmatprep.subr.mxu0 0.0
    %191 = vmatpush1.msra.mxu0 0.0
    %192 = vmatprep.subr.mxu0 0.0
    %193 = vmatpush1.msra.mxu0 0.0
    %194 = vmatprep.subr.mxu0 0.0
    %195 = vmatpush1.msra.mxu0 0.0
    %196 = vmatprep.subr.mxu0 0.0
    %197 = vmatpush1.msra.mxu0 0.0
    %198 = vmatprep.subr.mxu0 0.0
    %199 = vmatpush1.msra.mxu0 0.0
    %200 = vmatprep.subr.mxu0 0.0
    %201 = vmatpush1.msra.mxu0 0.0
    %202 = vmatprep.subr.mxu0 0.0
    %203 = vmatpush1.msra.mxu0 0.0
    %204 = vmatprep.subr.mxu0 0.0
    %205 = vmatpush1.msra.mxu0 0.0
    %206 = vmatprep.subr.mxu0 0.0
    %207 = vmatpush1.msra.mxu0 0.0
    %208 = vmatprep.subr.mxu0 0.0
    %209 = vmatpush1.msra.mxu0 0.0
    %210 = vmatprep.mubr.f32.mxu0 0.0
    %211 = vmatmul.mubr.f32.gmra.mrb[0].mxu0 %v131
    %v212 = vpop.f32.mrb[0].mxu0
    %v213 = vadd.f32 %v127, %v212
    %v214 = vpop.f32.mrb[0].mxu0
    %215 = vmatprep.mubr.f32.mxu0 0.0
    %216 = vmatmul.mubr.f32.gmra.mrb[0].mxu0 %v134
    %v217 = vpop.f32.mrb[0].mxu0
    %v218 = vadd.f32 %v127, %v217
    %v219 = vpop.f32.mrb[0].mxu0
    %220 = vmatprep.mubr.f32.mxu0 0.0
    %221 = vmatmul.mubr.f32.gmra.mrb[0].mxu0 %v137
    %v222 = vpop.f32.mrb[0].mxu0
    %v223 = vadd.f32 %v127, %v222
    %v224 = vpop.f32.mrb[0].mxu0
    %225 = vmatprep.mubr.f32.mxu0 0.0
    %226 = vmatmul.mubr.f32.gmra.mrb[0].mxu0 %v140
    %v227 = vpop.f32.mrb[0].mxu0
    %v228 = vadd.f32 %v127, %v227
    %v229 = vpop.f32.mrb[0].mxu0
    %230 = vdwg.mxu0
    %v231 = vadd.f32 %v213, %v218
    %v232 = vadd.f32 %v231, %v223
    %v233 = vadd.f32 %v232, %v228
    %v234 = vrot.slane %v233, 4
    %v235 = vadd.f32 %v233, %v234
    %v236 = vrot.slane %v235, 2
    %v237 = vadd.f32 %v235, %v236
    %v238 = vrot.slane %v237, 1
    %v239 = vadd.f32 %v237, %v238
    %v240 = vmul.f32 %v213, %v213
    %v241 = vmul.f32 %v218, %v218
    %v242 = vmul.f32 %v223, %v223
    %v243 = vmul.f32 %v228, %v228
    %v244 = vadd.f32 %v240, %v241
    %v245 = vadd.f32 %v244, %v242
    %v246 = vadd.f32 %v245, %v243
    %v247 = vrot.slane %v246, 4
    %v248 = vadd.f32 %v246, %v247
    %v249 = vrot.slane %v248, 2
    %v250 = vadd.f32 %v248, %v249
    %v251 = vrot.slane %v250, 1
    %v252 = vadd.f32 %v250, %v251
    %v253 = vmul.f32 %v239, 0.03125
    %v254 = vmul.f32 %v252, 0.03125
    %v255 = vmul.f32 %v253, %v253
    %v256 = vsub.f32 %v254, %v255
    %v257 = vmax.f32 %v256, 0.0
    %v258 = vsub.f32 %v213, %v253
    %v259 = vsub.f32 %v218, %v253
    %v260 = vsub.f32 %v223, %v253
    %v261 = vsub.f32 %v228, %v253
    %v262 = vadd.f32 %v257, 1e-05
    %v263 = vrsqrt.pop %v262
    %v264 = vmul.f32 %v258, %v263
    %v265 = vmul.f32 %v259, %v263
    %v266 = vmul.f32 %v260, %v263
    %v267 = vmul.f32 %v261, %v263
    %v269 = vlaneseq
    %v270 = vshrl.u32 %v269, 7
    %v271 = vsub.s32 0, %v270
    %v272 = vrot.slane %v57, %v271
    %v274 = vmul.f32 %v264, %v272
    %v275 = vmul.f32 %v265, %v272
    %v276 = vmul.f32 %v266, %v272
    %v277 = vmul.f32 %v267, %v272
    %v279 = vlaneseq
    %v280 = vshrl.u32 %v279, 7
    %v281 = vsub.s32 0, %v280
    %v282 = vrot.slane %v58, %v281
    %v284 = vadd.f32 %v274, %v282
    %v285 = vadd.f32 %v275, %v282
    %v286 = vadd.f32 %v276, %v282
    %v287 = vadd.f32 %v277, %v282
    %v288 = vmax.f32 %v284, 0.0
    %v289 = vmax.f32 %v285, 0.0
    %v290 = vmax.f32 %v286, 0.0
    %v291 = vmax.f32 %v287, 0.0
    %v292 = vld [vmem:[#allocation2] sm:$0xff]
    %v293 = vld [vmem:[#allocation2 + $0x8] sm:$0xff]
    %v294 = vld [vmem:[#allocation2 + $0x10] sm:$0xff]
    %v295 = vld [vmem:[#allocation2 + $0x18] sm:$0xff]
    %v296 = vld [vmem:[#allocation2 + $0x20] sm:$0xff]
    %v297 = vld [vmem:[#allocation2 + $0x28] sm:$0xff]
    %v298 = vld [vmem:[#allocation2 + $0x30] sm:$0xff]
    %v299 = vld [vmem:[#allocation2 + $0x38] sm:$0xff]
    %v300 = vld [vmem:[#allocation2 + $0x40] sm:$0xff]
    %v301 = vld [vmem:[#allocation2 + $0x48] sm:$0xff]
    %v302 = vld [vmem:[#allocation2 + $0x50] sm:$0xff]
    %v303 = vld [vmem:[#allocation2 + $0x58] sm:$0xff]
    %v304 = vld [vmem:[#allocation2 + $0x60] sm:$0xff]
    %v305 = vld [vmem:[#allocation2 + $0x68] sm:$0xff]
    %v306 = vld [vmem:[#allocation2 + $0x70] sm:$0xff]
    %v307 = vld [vmem:[#allocation2 + $0x78] sm:$0xff]
    %v308 = vld [vmem:[#allocation2 + $0x80] sm:$0xff]
    %v309 = vld [vmem:[#allocation2 + $0x88] sm:$0xff]
    %v310 = vld [vmem:[#allocation2 + $0x90] sm:$0xff]
    %v311 = vld [vmem:[#allocation2 + $0x98] sm:$0xff]
    %v312 = vld [vmem:[#allocation2 + $0xa0] sm:$0xff]
    %v313 = vld [vmem:[#allocation2 + $0xa8] sm:$0xff]
    %v314 = vld [vmem:[#allocation2 + $0xb0] sm:$0xff]
    %v315 = vld [vmem:[#allocation2 + $0xb8] sm:$0xff]
    %v316 = vld [vmem:[#allocation2 + $0xc0] sm:$0xff]
    %v317 = vld [vmem:[#allocation2 + $0xc8] sm:$0xff]
    %v318 = vld [vmem:[#allocation2 + $0xd0] sm:$0xff]
    %v319 = vld [vmem:[#allocation2 + $0xd8] sm:$0xff]
    %v320 = vld [vmem:[#allocation2 + $0xe0] sm:$0xff]
    %v321 = vld [vmem:[#allocation2 + $0xe8] sm:$0xff]
    %v322 = vld [vmem:[#allocation2 + $0xf0] sm:$0xff]
    %v323 = vld [vmem:[#allocation2 + $0xf8] sm:$0xff]
    %v324 = vld [vmem:[#allocation2 + $0x100] sm:$0xff]
    %v325 = vld [vmem:[#allocation2 + $0x108] sm:$0xff]
    %v326 = vld [vmem:[#allocation2 + $0x110] sm:$0xff]
    %v327 = vld [vmem:[#allocation2 + $0x118] sm:$0xff]
    %v328 = vld [vmem:[#allocation2 + $0x120] sm:$0xff]
    %v329 = vld [vmem:[#allocation2 + $0x128] sm:$0xff]
    %v330 = vld [vmem:[#allocation2 + $0x130] sm:$0xff]
    %v331 = vld [vmem:[#allocation2 + $0x138] sm:$0xff]
    %v332 = vld [vmem:[#allocation2 + $0x140] sm:$0xff]
    %v333 = vld [vmem:[#allocation2 + $0x148] sm:$0xff]
    %v334 = vld [vmem:[#allocation2 + $0x150] sm:$0xff]
    %v335 = vld [vmem:[#allocation2 + $0x158] sm:$0xff]
    %v336 = vld [vmem:[#allocation2 + $0x160] sm:$0xff]
    %v337 = vld [vmem:[#allocation2 + $0x168] sm:$0xff]
    %v338 = vld [vmem:[#allocation2 + $0x170] sm:$0xff]
    %v339 = vld [vmem:[#allocation2 + $0x178] sm:$0xff]
    %v340 = vld [vmem:[%s6] sm:$0x1]
    %v341 = vld [vmem:[%s7] sm:$0x1]
    %v342 = vld [vmem:[%s8] sm:$0x1]
    %v347 = vrot.slane %v288, 7
    %v348 = vrot.slane %v289, 7
    %v349 = vsel %vm63, %v347, %v348
    %v350 = vrot.slane %v290, 7
    %v351 = vrot.slane %v291, 7
    %v352 = vsel %vm63, %v350, %v351
    %v357 = vsel %vm63, 0.0, %v347
    %v358 = vsel %vm63, 0.0, %v350
    %v359 = vrot.slane %v288, 1
    %v360 = vrot.slane %v289, 1
    %v361 = vsel %vm76, %v359, %v360
    %v362 = vrot.slane %v290, 1
    %v363 = vrot.slane %v291, 1
    %v364 = vsel %vm76, %v362, %v363
    %v369 = vsel %vm76, %v360, 0.0
    %v370 = vsel %vm76, %v363, 0.0
    %v372 = vlaneseq
    %v373 = vshrl.u32 %v372, 7
    %v374 = vsub.s32 0, %v373
    %v375 = vrot.slane %v340, %v374
    %377 = vmatprep.subr.mxu0 0.0
    %378 = vmatpush1.msra.mxu0 %v292
    %379 = vmatprep.subr.mxu0 0.0
    %380 = vmatpush1.msra.mxu0 %v293
    %381 = vmatprep.subr.mxu0 0.0
    %382 = vmatpush1.msra.mxu0 %v294
    %383 = vmatprep.subr.mxu0 0.0
    %384 = vmatpush1.msra.mxu0 %v295
    %385 = vmatprep.subr.mxu0 0.0
    %386 = vmatpush1.msra.mxu0 %v296
    %387 = vmatprep.subr.mxu0 0.0
    %388 = vmatpush1.msra.mxu0 %v297
    %389 = vmatprep.subr.mxu0 0.0
    %390 = vmatpush1.msra.mxu0 %v298
    %391 = vmatprep.subr.mxu0 0.0
    %392 = vmatpush1.msra.mxu0 %v299
    %393 = vmatprep.subr.mxu0 0.0
    %394 = vmatpush1.msra.mxu0 %v300
    %395 = vmatprep.subr.mxu0 0.0
    %396 = vmatpush1.msra.mxu0 %v301
    %397 = vmatprep.subr.mxu0 0.0
    %398 = vmatpush1.msra.mxu0 %v302
    %399 = vmatprep.subr.mxu0 0.0
    %400 = vmatpush1.msra.mxu0 %v303
    %401 = vmatprep.subr.mxu0 0.0
    %402 = vmatpush1.msra.mxu0 %v304
    %403 = vmatprep.subr.mxu0 0.0
    %404 = vmatpush1.msra.mxu0 %v305
    %405 = vmatprep.subr.mxu0 0.0
    %406 = vmatpush1.msra.mxu0 %v306
    %407 = vmatprep.subr.mxu0 0.0
    %408 = vmatpush1.msra.mxu0 %v307
    %409 = vmatprep.subr.mxu0 0.0
    %410 = vmatpush1.msra.mxu0 %v308
    %411 = vmatprep.subr.mxu0 0.0
    %412 = vmatpush1.msra.mxu0 %v309
    %413 = vmatprep.subr.mxu0 0.0
    %414 = vmatpush1.msra.mxu0 %v310
    %415 = vmatprep.subr.mxu0 0.0
    %416 = vmatpush1.msra.mxu0 %v311
    %417 = vmatprep.subr.mxu0 0.0
    %418 = vmatpush1.msra.mxu0 %v312
    %419 = vmatprep.subr.mxu0 0.0
    %420 = vmatpush1.msra.mxu0 %v313
    %421 = vmatprep.subr.mxu0 0.0
    %422 = vmatpush1.msra.mxu0 %v314
    %423 = vmatprep.subr.mxu0 0.0
    %424 = vmatpush1.msra.mxu0 %v315
    %425 = vmatprep.subr.mxu0 0.0
    %426 = vmatpush1.msra.mxu0 %v316
    %427 = vmatprep.subr.mxu0 0.0
    %428 = vmatpush1.msra.mxu0 %v317
    %429 = vmatprep.subr.mxu0 0.0
    %430 = vmatpush1.msra.mxu0 %v318
    %431 = vmatprep.subr.mxu0 0.0
    %432 = vmatpush1.msra.mxu0 %v319
    %433 = vmatprep.subr.mxu0 0.0
    %434 = vmatpush1.msra.mxu0 %v320
    %435 = vmatprep.subr.mxu0 0.0
    %436 = vmatpush1.msra.mxu0 %v321
    %437 = vmatprep.subr.mxu0 0.0
    %438 = vmatpush1.msra.mxu0 %v322
    %439 = vmatprep.subr.mxu0 0.0
    %440 = vmatpush1.msra.mxu0 %v323
    %441 = vmatprep.mubr.f32.mxu0 %v288
    %442 = vmatmul.mubr.f32.gmra.mrb[0].mxu0 %v357
    %v443 = vpop.f32.mrb[0].mxu0
    %v444 = vadd.f32 %v375, %v443
    %v445 = vpop.f32.mrb[0].mxu0
    %446 = vmatprep.mubr.f32.mxu0 %v289
    %447 = vmatmul.mubr.f32.gmra.mrb[0].mxu0 %v349
    %v448 = vpop.f32.mrb[0].mxu0
    %v449 = vadd.f32 %v375, %v448
    %v450 = vpop.f32.mrb[0].mxu0
    %451 = vmatprep.mubr.f32.mxu0 %v290
    %452 = vmatmul.mubr.f32.gmra.mrb[0].mxu0 %v358
    %v453 = vpop.f32.mrb[0].mxu0
    %v454 = vadd.f32 %v375, %v453
    %v455 = vpop.f32.mrb[0].mxu0
    %456 = vmatprep.mubr.f32.mxu0 %v291
    %457 = vmatmul.mubr.f32.gmra.mrb[0].mxu0 %v352
    %v458 = vpop.f32.mrb[0].mxu0
    %v459 = vadd.f32 %v375, %v458
    %v460 = vpop.f32.mrb[0].mxu0
    %461 = vdwg.mxu0
    %462 = vmatprep.subr.mxu0 0.0
    %463 = vmatpush1.msra.mxu0 %v324
    %464 = vmatprep.subr.mxu0 0.0
    %465 = vmatpush1.msra.mxu0 %v325
    %466 = vmatprep.subr.mxu0 0.0
    %467 = vmatpush1.msra.mxu0 %v326
    %468 = vmatprep.subr.mxu0 0.0
    %469 = vmatpush1.msra.mxu0 %v327
    %470 = vmatprep.subr.mxu0 0.0
    %471 = vmatpush1.msra.mxu0 %v328
    %472 = vmatprep.subr.mxu0 0.0
    %473 = vmatpush1.msra.mxu0 %v329
    %474 = vmatprep.subr.mxu0 0.0
    %475 = vmatpush1.msra.mxu0 %v330
    %476 = vmatprep.subr.mxu0 0.0
    %477 = vmatpush1.msra.mxu0 %v331
    %478 = vmatprep.subr.mxu0 0.0
    %479 = vmatpush1.msra.mxu0 %v332
    %480 = vmatprep.subr.mxu0 0.0
    %481 = vmatpush1.msra.mxu0 %v333
    %482 = vmatprep.subr.mxu0 0.0
    %483 = vmatpush1.msra.mxu0 %v334
    %484 = vmatprep.subr.mxu0 0.0
    %485 = vmatpush1.msra.mxu0 %v335
    %486 = vmatprep.subr.mxu0 0.0
    %487 = vmatpush1.msra.mxu0 %v336
    %488 = vmatprep.subr.mxu0 0.0
    %489 = vmatpush1.msra.mxu0 %v337
    %490 = vmatprep.subr.mxu0 0.0
    %491 = vmatpush1.msra.mxu0 %v338
    %492 = vmatprep.subr.mxu0 0.0
    %493 = vmatpush1.msra.mxu0 %v339
    %494 = vmatprep.subr.mxu0 0.0
    %495 = vmatpush1.msra.mxu0 0.0
    %496 = vmatprep.subr.mxu0 0.0
    %497 = vmatpush1.msra.mxu0 0.0
    %498 = vmatprep.subr.mxu0 0.0
    %499 = vmatpush1.msra.mxu0 0.0
    %500 = vmatprep.subr.mxu0 0.0
    %501 = vmatpush1.msra.mxu0 0.0
    %502 = vmatprep.subr.mxu0 0.0
    %503 = vmatpush1.msra.mxu0 0.0
    %504 = vmatprep.subr.mxu0 0.0
    %505 = vmatpush1.msra.mxu0 0.0
    %506 = vmatprep.subr.mxu0 0.0
    %507 = vmatpush1.msra.mxu0 0.0
    %508 = vmatprep.subr.mxu0 0.0
    %509 = vmatpush1.msra.mxu0 0.0
    %510 = vmatprep.subr.mxu0 0.0
    %511 = vmatpush1.msra.mxu0 0.0
    %512 = vmatprep.subr.mxu0 0.0
    %513 = vmatpush1.msra.mxu0 0.0
    %514 = vmatprep.subr.mxu0 0.0
    %515 = vmatpush1.msra.mxu0 0.0
    %516 = vmatprep.subr.mxu0 0.0
    %517 = vmatpush1.msra.mxu0 0.0
    %518 = vmatprep.subr.mxu0 0.0
    %519 = vmatpush1.msra.mxu0 0.0
    %520 = vmatprep.subr.mxu0 0.0
    %521 = vmatpush1.msra.mxu0 0.0
    %522 = vmatprep.subr.mxu0 0.0
    %523 = vmatpush1.msra.mxu0 0.0
    %524 = vmatprep.subr.mxu0 0.0
    %525 = vmatpush1.msra.mxu0 0.0
    %526 = vmatprep.mubr.f32.mxu0 0.0
    %527 = vmatmul.mubr.f32.gmra.mrb[0].mxu0 %v361
    %v528 = vpop.f32.mrb[0].mxu0
    %v529 = vadd.f32 %v444, %v528
    %v530 = vpop.f32.mrb[0].mxu0
    %531 = vmatprep.mubr.f32.mxu0 0.0
    %532 = vmatmul.mubr.f32.gmra.mrb[0].mxu0 %v369
    %v533 = vpop.f32.mrb[0].mxu0
    %v534 = vadd.f32 %v449, %v533
    %v535 = vpop.f32.mrb[0].mxu0
    %536 = vmatprep.mubr.f32.mxu0 0.0
    %537 = vmatmul.mubr.f32.gmra.mrb[0].mxu0 %v364
    %v538 = vpop.f32.mrb[0].mxu0
    %v539 = vadd.f32 %v454, %v538
    %v540 = vpop.f32.mrb[0].mxu0
    %541 = vmatprep.mubr.f32.mxu0 0.0
    %542 = vmatmul.mubr.f32.gmra.mrb[0].mxu0 %v370
    %v543 = vpop.f32.mrb[0].mxu0
    %v544 = vadd.f32 %v459, %v543
    %v545 = vpop.f32.mrb[0].mxu0
    %546 = vdwg.mxu0
    %v547 = vadd.f32 %v529, %v534
    %v548 = vadd.f32 %v547, %v539
    %v549 = vadd.f32 %v548, %v544
    %v550 = vrot.slane %v549, 4
    %v551 = vadd.f32 %v549, %v550
    %v552 = vrot.slane %v551, 2
    %v553 = vadd.f32 %v551, %v552
    %v554 = vrot.slane %v553, 1
    %v555 = vadd.f32 %v553, %v554
    %v556 = vmul.f32 %v529, %v529
    %v557 = vmul.f32 %v534, %v534
    %v558 = vmul.f32 %v539, %v539
    %v559 = vmul.f32 %v544, %v544
    %v560 = vadd.f32 %v556, %v557
    %v561 = vadd.f32 %v560, %v558
    %v562 = vadd.f32 %v561, %v559
    %v563 = vrot.slane %v562, 4
    %v564 = vadd.f32 %v562, %v563
    %v565 = vrot.slane %v564, 2
    %v566 = vadd.f32 %v564, %v565
    %v567 = vrot.slane %v566, 1
    %v568 = vadd.f32 %v566, %v567
    %v569 = vmul.f32 %v555, 0.03125
    %v570 = vmul.f32 %v568, 0.03125
    %v571 = vmul.f32 %v569, %v569
    %v572 = vsub.f32 %v570, %v571
    %v573 = vmax.f32 %v572, 0.0
    %v574 = vsub.f32 %v529, %v569
    %v575 = vsub.f32 %v534, %v569
    %v576 = vsub.f32 %v539, %v569
    %v577 = vsub.f32 %v544, %v569
    %v578 = vadd.f32 %v573, 1e-05
    %v579 = vrsqrt.pop %v578
    %v580 = vmul.f32 %v574, %v579
    %v581 = vmul.f32 %v575, %v579
    %v582 = vmul.f32 %v576, %v579
    %v583 = vmul.f32 %v577, %v579
    %v585 = vlaneseq
    %v586 = vshrl.u32 %v585, 7
    %v587 = vsub.s32 0, %v586
    %v588 = vrot.slane %v341, %v587
    %v590 = vmul.f32 %v580, %v588
    %v591 = vmul.f32 %v581, %v588
    %v592 = vmul.f32 %v582, %v588
    %v593 = vmul.f32 %v583, %v588
    %v595 = vlaneseq
    %v596 = vshrl.u32 %v595, 7
    %v597 = vsub.s32 0, %v596
    %v598 = vrot.slane %v342, %v597
    %v600 = vadd.f32 %v590, %v598
    %v601 = vadd.f32 %v591, %v598
    %v602 = vadd.f32 %v592, %v598
    %v603 = vadd.f32 %v593, %v598
    %v604 = vmax.f32 %v600, 0.0
    %v605 = vmax.f32 %v601, 0.0
    %v606 = vmax.f32 %v602, 0.0
    %v607 = vmax.f32 %v603, 0.0
    %608 = vst [vmem:[#allocation5] sm:$0xff] %v604
    %609 = vst [vmem:[#allocation5 + $0x8] sm:$0xff] %v605
    %610 = vst [vmem:[#allocation5 + $0x10] sm:$0xff] %v606
    %611 = vst [vmem:[#allocation5 + $0x18] sm:$0xff] %v607
    %v616 = vcombine.high %v604, %v604
    %v618 = vunpack.c.l.s4 1983009808
    %v619 = vunpack.c.0.s8 %v618
    %v620 = vlaneseq
    %v621 = vshrl.u32 %v620, 7
    %v622 = vsub.s32 %v619, %v621
    %v623 = vrot.slane %v604, %v622
    %v625 = vunpack.c.l.s4 1983009808
    %v626 = vunpack.c.0.s8 %v625
    %v627 = vlaneseq
    %v628 = vshrl.u32 %v627, 7
    %v629 = vsub.s32 %v626, %v628
    %v630 = vrot.slane %v616, %v629
    %v631 = vcombine.high %v623, %v623
    %v632 = vcombine.high %v630, %v630
    %v633 = vcombine.high %v605, %v605
    %v635 = vunpack.c.l.s4 1983009808
    %v636 = vunpack.c.0.s8 %v635
    %v637 = vlaneseq
    %v638 = vshrl.u32 %v637, 7
    %v639 = vsub.s32 %v636, %v638
    %v640 = vrot.slane %v605, %v639
    %v642 = vunpack.c.l.s4 1983009808
    %v643 = vunpack.c.0.s8 %v642
    %v644 = vlaneseq
    %v645 = vshrl.u32 %v644, 7
    %v646 = vsub.s32 %v643, %v645
    %v647 = vrot.slane %v633, %v646
    %v648 = vcombine.high %v640, %v640
    %v649 = vcombine.high %v647, %v647
    %v650 = vcombine.high %v606, %v606
    %v652 = vunpack.c.l.s4 1983009808
    %v653 = vunpack.c.0.s8 %v652
    %v654 = vlaneseq
    %v655 = vshrl.u32 %v654, 7
    %v656 = vsub.s32 %v653, %v655
    %v657 = vrot.slane %v606, %v656
    %v659 = vunpack.c.l.s4 1983009808
    %v660 = vunpack.c.0.s8 %v659
    %v661 = vlaneseq
    %v662 = vshrl.u32 %v661, 7
    %v663 = vsub.s32 %v660, %v662
    %v664 = vrot.slane %v650, %v663
    %v665 = vcombine.high %v657, %v657
    %v666 = vcombine.high %v664, %v664
    %v667 = vcombine.high %v607, %v607
    %v669 = vunpack.c.l.s4 1983009808
    %v670 = vunpack.c.0.s8 %v669
    %v671 = vlaneseq
    %v672 = vshrl.u32 %v671, 7
    %v673 = vsub.s32 %v670, %v672
    %v674 = vrot.slane %v607, %v673
    %v676 = vunpack.c.l.s4 1983009808
    %v677 = vunpack.c.0.s8 %v676
    %v678 = vlaneseq
    %v679 = vshrl.u32 %v678, 7
    %v680 = vsub.s32 %v677, %v679
    %v681 = vrot.slane %v667, %v680
    %v682 = vcombine.high %v674, %v674
    %v683 = vcombine.high %v681, %v681
    %vm700 = vcmask 1041408
    %v701 = vsel %vm700, %v623, -inf
    %v702 = vrot.slane %v701, 4
    %v703 = vmax.f32 %v701, %v702
    %v704 = vrot.slane %v703, 2
    %v705 = vmax.f32 %v703, %v704
    %v706 = vrot.slane %v705, 1
    %v707 = vmax.f32 %v705, %v706
    %v708 = vsel %vm700, %v631, -inf
    %v709 = vrot.slane %v708, 4
    %v710 = vmax.f32 %v708, %v709
    %v711 = vrot.slane %v710, 2
    %v712 = vmax.f32 %v710, %v711
    %v713 = vrot.slane %v712, 1
    %v714 = vmax.f32 %v712, %v713
    %v715 = vsel %vm700, %v630, -inf
    %v716 = vrot.slane %v715, 4
    %v717 = vmax.f32 %v715, %v716
    %v718 = vrot.slane %v717, 2
    %v719 = vmax.f32 %v717, %v718
    %v720 = vrot.slane %v719, 1
    %v721 = vmax.f32 %v719, %v720
    %v722 = vsel %vm700, %v632, -inf
    %v723 = vrot.slane %v722, 4
    %v724 = vmax.f32 %v722, %v723
    %v725 = vrot.slane %v724, 2
    %v726 = vmax.f32 %v724, %v725
    %v727 = vrot.slane %v726, 1
    %v728 = vmax.f32 %v726, %v727
    %v729 = vsel %vm700, %v640, -inf
    %v730 = vrot.slane %v729, 4
    %v731 = vmax.f32 %v729, %v730
    %v732 = vrot.slane %v731, 2
    %v733 = vmax.f32 %v731, %v732
    %v734 = vrot.slane %v733, 1
    %v735 = vmax.f32 %v733, %v734
    %v736 = vsel %vm700, %v648, -inf
    %v737 = vrot.slane %v736, 4
    %v738 = vmax.f32 %v736, %v737
    %v739 = vrot.slane %v738, 2
    %v740 = vmax.f32 %v738, %v739
    %v741 = vrot.slane %v740, 1
    %v742 = vmax.f32 %v740, %v741
    %v743 = vsel %vm700, %v647, -inf
    %v744 = vrot.slane %v743, 4
    %v745 = vmax.f32 %v743, %v744
    %v746 = vrot.slane %v745, 2
    %v747 = vmax.f32 %v745, %v746
    %v748 = vrot.slane %v747, 1
    %v749 = vmax.f32 %v747, %v748
    %v750 = vsel %vm700, %v649, -inf
    %v751 = vrot.slane %v750, 4
    %v752 = vmax.f32 %v750, %v751
    %v753 = vrot.slane %v752, 2
    %v754 = vmax.f32 %v752, %v753
    %v755 = vrot.slane %v754, 1
    %v756 = vmax.f32 %v754, %v755
    %v757 = vsel %vm700, %v657, -inf
    %v758 = vrot.slane %v757, 4
    %v759 = vmax.f32 %v757, %v758
    %v760 = vrot.slane %v759, 2
    %v761 = vmax.f32 %v759, %v760
    %v762 = vrot.slane %v761, 1
    %v763 = vmax.f32 %v761, %v762
    %v764 = vsel %vm700, %v665, -inf
    %v765 = vrot.slane %v764, 4
    %v766 = vmax.f32 %v764, %v765
    %v767 = vrot.slane %v766, 2
    %v768 = vmax.f32 %v766, %v767
    %v769 = vrot.slane %v768, 1
    %v770 = vmax.f32 %v768, %v769
    %v771 = vsel %vm700, %v664, -inf
    %v772 = vrot.slane %v771, 4
    %v773 = vmax.f32 %v771, %v772
    %v774 = vrot.slane %v773, 2
    %v775 = vmax.f32 %v773, %v774
    %v776 = vrot.slane %v775, 1
    %v777 = vmax.f32 %v775, %v776
    %v778 = vsel %vm700, %v666, -inf
    %v779 = vrot.slane %v778, 4
    %v780 = vmax.f32 %v778, %v779
    %v781 = vrot.slane %v780, 2
    %v782 = vmax.f32 %v780, %v781
    %v783 = vrot.slane %v782, 1
    %v784 = vmax.f32 %v782, %v783
    %v785 = vsel %vm700, %v674, -inf
    %v786 = vrot.slane %v785, 4
    %v787 = vmax.f32 %v785, %v786
    %v788 = vrot.slane %v787, 2
    %v789 = vmax.f32 %v787, %v788
    %v790 = vrot.slane %v789, 1
    %v791 = vmax.f32 %v789, %v790
    %v792 = vsel %vm700, %v682, -inf
    %v793 = vrot.slane %v792, 4
    %v794 = vmax.f32 %v792, %v793
    %v795 = vrot.slane %v794, 2
    %v796 = vmax.f32 %v794, %v795
    %v797 = vrot.slane %v796, 1
    %v798 = vmax.f32 %v796, %v797
    %v799 = vsel %vm700, %v681, -inf
    %v800 = vrot.slane %v799, 4
    %v801 = vmax.f32 %v799, %v800
    %v802 = vrot.slane %v801, 2
    %v803 = vmax.f32 %v801, %v802
    %v804 = vrot.slane %v803, 1
    %v805 = vmax.f32 %v803, %v804
    %v806 = vsel %vm700, %v683, -inf
    %v807 = vrot.slane %v806, 4
    %v808 = vmax.f32 %v806, %v807
    %v809 = vrot.slane %v808, 2
    %v810 = vmax.f32 %v808, %v809
    %v811 = vrot.slane %v810, 1
    %v812 = vmax.f32 %v810, %v811
    %vm829 = vcmask 1041409
    %v830 = vsel %vm829, %v714, %v707
    %vm831 = vcmask 1042434
    %v832 = vsel %vm831, %v721, %v830
    %vm833 = vcmask 1043459
    %v834 = vsel %vm833, %v728, %v832
    %vm835 = vcmask 1044484
    %v836 = vsel %vm835, %v735, %v834
    %vm837 = vcmask 1045509
    %v838 = vsel %vm837, %v742, %v836
    %vm839 = vcmask 1046534
    %v840 = vsel %vm839, %v749, %v838
    %vm841 = vcmask 1047559
    %v842 = vsel %vm841, %v756, %v840
    %v843 = vsel %vm829, %v770, %v763
    %v844 = vsel %vm831, %v777, %v843
    %v845 = vsel %vm833, %v784, %v844
    %v846 = vsel %vm835, %v791, %v845
    %v847 = vsel %vm837, %v798, %v846
    %v848 = vsel %vm839, %v805, %v847
    %v849 = vsel %vm841, %v812, %v848
    %852 = vst [vmem:[#allocation6] sm:$0xff] %v842
    %853 = vst [vmem:[#allocation6 + $0x8] sm:$0xff] %v849
    // Predicated region
    $region42: #{tpu_custom_call.1} parent=1 // pred_check
      _
    $region43: #{tpu_custom_call.1} parent=1 // pred_check_branch
      %855 = sbr.rel (0) target = $region45
    $region44: #{tpu_custom_call.1} parent=1 // pred_region
      %s857 = ssub.s32 512, 512
      %858 = vsyncadd [#allocation4], %s857
      %s859 = sshll.u32 [#allocation5], 4
      %s860 = int_to_ptr.vmem [resolvable:$true] %s859
      %865 = dma.vmem_to_hbm [thread:$0]  %s860, 512, %s9, [#allocation4], 128, 128, 8
    $region45: #{tpu_custom_call.1} parent=1 // pred_fallthru
      _
    // Predicated region
    $region46: #{tpu_custom_call.1} parent=1 // pred_check
      _
    $region47: #{tpu_custom_call.1} parent=1 // pred_check_branch
      %867 = sbr.rel (0) target = $region49
    $region48: #{tpu_custom_call.1} parent=1 // pred_region
      %s869 = ssub.s32 256, 256
      %870 = vsyncadd [#allocation7], %s869
      %s871 = sshll.u32 [#allocation6], 4
      %s872 = int_to_ptr.vmem [resolvable:$true] %s871
      %877 = dma.vmem_to_hbm [thread:$0]  %s872, 256, %s10, [#allocation7], 128, 128, 8
    $region49: #{tpu_custom_call.1} parent=1 // pred_fallthru
      _
    // Predicated region
    $region50: #{tpu_custom_call.1} parent=1 // pred_check
      _
    $region51: #{tpu_custom_call.1} parent=1 // pred_check_branch
      %879 = sbr.rel (0) target = $region53
    $region52: #{tpu_custom_call.1} parent=1 // pred_region
      %880 = dma.done [#allocation4], 512
    $region53: #{tpu_custom_call.1} parent=1 // pred_fallthru
      _
    // Predicated region
    $region54: #{tpu_custom_call.1} parent=1 // pred_check
      _
    $region55: #{tpu_custom_call.1} parent=1 // pred_check_branch
      %882 = sbr.rel (0) target = $region57
    $region56: #{tpu_custom_call.1} parent=1 // pred_region
      %883 = dma.done [#allocation7], 256
    $region57: #{tpu_custom_call.1} parent=1 // pred_fallthru
      _
    %884 = vsyncpa [#allocation3], 1
    %885 = vsyncpa [#allocation4], 1
    %886 = vsyncpa [#allocation7], 1

</llo_original>
